<compile_context>
chip_gen: v7x
topology: tpu7x:2x2x1
jax: 0.10.0
libtpu: 0.0.40
codegen_flags: <defaults>
</compile_context>

<pallas_src>
import functools

import jax
import jax.numpy as jnp
from jax.experimental import pallas as pl
from jax.experimental.pallas import tpu as pltpu


def _round_up(x, m):
    return (x + m - 1) // m * m


# ---------------------------------------------------------------------------
# Fused 2-layer GCN kernel.
#   grid = (2, T): axis 0 = layer, axis 1 = destination-row tile.
#   adj_ref      : int8 {0,1} adjacency (adj[dst, src], self loops included)
#                  either resident (Np, Np) or a streamed (TM, Np) row slab
#   x_ref        : (Np, Fin) f32 node features           (resident)
#   dinv_full_ref: (Np, 1)  f32 deg^{-1/2}               (resident)
#   dinv_rows_ref: (TM, 1)  f32 deg^{-1/2} for this tile
#   w1/b1        : (Fin, Hp), (1, Hp)                    (resident)
#   w2/b2        : (Hp, Cp), (1, Cp)                     (resident)
#   out_ref      : (TM, Cp) f32 output tile
#   z1_sc        : (Np, Hp) bf16 = dinv * (X @ W1)   (persists across steps)
#   z2_sc        : (Np, Cp) bf16 = dinv * (H1 @ W2)  (persists across steps)
# ---------------------------------------------------------------------------
def gcn_fused_kernel(adj_ref, x_ref, dinv_full_ref, dinv_rows_ref,
                     w1_ref, b1_ref, w2_ref, b2_ref,
                     out_ref, z1_sc, z2_sc, *, tm, adj_resident):
    layer = pl.program_id(0)
    t = pl.program_id(1)
    r0 = pl.multiple_of(t * tm, tm)

    # Hoisted once (layer 0, tile 0): z1 = D^-1/2 * (X @ W1), computed in f32,
    # stored bf16 so the big aggregation matmul runs on the native bf16 MXU.
    @pl.when(jnp.logical_and(layer == 0, t == 0))
    def _():
        z1 = dinv_full_ref[...] * jnp.dot(
            x_ref[...], w1_ref[...], preferred_element_type=jnp.float32)
        z1_sc[...] = z1.astype(jnp.bfloat16)

    # Adjacency rows for this tile, widened int8 {0,1} -> bf16 (values exact).
    if adj_resident:
        a = adj_ref[pl.ds(r0, tm), :].astype(jnp.bfloat16)
    else:
        a = adj_ref[...].astype(jnp.bfloat16)

    dinv_rows = dinv_rows_ref[...]                       # (TM, 1) f32

    # --- layer 0: h1[rows] = relu(D^-1/2 A D^-1/2 X W1 + b1), then fold the
    #     second feature transform immediately (no persistent hidden buffer):
    #     z2[rows] = D^-1/2 * (h1[rows] @ W2), stored bf16.
    @pl.when(layer == 0)
    def _():
        agg = dinv_rows * jnp.dot(a, z1_sc[...],
                                  preferred_element_type=jnp.float32)
        h1 = jnp.maximum(agg + b1_ref[...], 0.0)         # (TM, Hp) f32
        # TODO(synk): dropout is identity at inference.
        z2 = dinv_rows * jnp.dot(h1, w2_ref[...],
                                 preferred_element_type=jnp.float32)
        z2_sc[pl.ds(r0, tm), :] = z2.astype(jnp.bfloat16)

    # --- layer 1: out[rows] = D^-1/2 A z2 + b2 -----------------------------
    @pl.when(layer == 1)
    def _():
        out_ref[...] = (
            dinv_rows * jnp.dot(a, z2_sc[...],
                                preferred_element_type=jnp.float32)
            + b2_ref[...])


# ---------------------------------------------------------------------------
# Wrapper: graph glue (plain JAX), padding, pallas_call.
# ---------------------------------------------------------------------------
def gcn_forward(x, edge_index, params):
    w1, b1 = params["w1"], params["b1"]          # (Fin, H), (H,)
    w2, b2 = params["w2"], params["b2"]          # (H, C),  (C,)
    N, Fin = x.shape
    H = w1.shape[1]
    C = w2.shape[1]

    # Row tile: 256 fills the 256-wide MXUs of v6e/v7x, 128 matches v5e's.
    # Always a multiple of 32 so int8 (32,128) sublane tiles stay aligned.
    kind = jax.devices()[0].device_kind.lower()
    tm_cap = 128 if "v5" in kind else 256
    TM = min(tm_cap, _round_up(N, 32))
    Np = _round_up(N, TM)
    Hp = _round_up(H, 128)
    Cp = _round_up(C, 128)
    T = Np // TM

    # Keep the adjacency VMEM-resident when it fits the budget (read once for
    # both layers instead of once per layer -> halves dominant HBM traffic).
    adj_resident = (Np * Np) <= (4 << 20)        # int8 bytes (x2 buffers)

    # Dense adjacency with self loops (GCNConv default add_self_loops=True),
    # adj[dst, src] = 1, built directly in int8.  Degrees via scatter-add over
    # edge_index (+1 self loop); assumes a simple graph (no duplicate edges).
    src, dst = edge_index[0], edge_index[1]
    adj = jnp.zeros((Np, Np), jnp.int8).at[dst, src].set(1)
    adj = adj.at[jnp.arange(N), jnp.arange(N)].set(1)
    deg = jnp.zeros((Np,), jnp.float32).at[dst].add(1.0).at[:N].add(1.0)
    dinv = jax.lax.rsqrt(jnp.maximum(deg, 1.0)).reshape(Np, 1)  # deg^{-1/2}

    # Zero-pad features / weights so every HBM store is lane-dense.
    xp = jnp.zeros((Np, Fin), jnp.float32).at[:N].set(x.astype(jnp.float32))
    w1p = jnp.zeros((Fin, Hp), jnp.float32).at[:, :H].set(w1)
    b1p = jnp.zeros((1, Hp), jnp.float32).at[0, :H].set(b1)
    w2p = jnp.zeros((Hp, Cp), jnp.float32).at[:H, :C].set(w2)
    b2p = jnp.zeros((1, Cp), jnp.float32).at[0, :C].set(b2)

    if adj_resident:
        adj_spec = pl.BlockSpec((Np, Np), lambda l, t: (0, 0))
    else:
        adj_spec = pl.BlockSpec((TM, Np), lambda l, t: (t, 0))

    # Explicit VMEM budget (scoped default: 16 MiB v5e, 32 MiB v6e/v7x).
    adj_vmem = 2 * (Np * Np if adj_resident else TM * Np)          # int8
    z_vmem = Np * (Hp + Cp) * 2                                    # bf16 scratch
    in_vmem = 2 * (Np * Fin + Np + TM + Fin * Hp + Hp + Hp * Cp + Cp) * 4
    out_vmem = 2 * TM * Cp * 4
    vmem_limit = int(min(max(adj_vmem + z_vmem + in_vmem + out_vmem + (8 << 20),
                             32 << 20),
                         56 << 20))              # stay under v7x 64 MiB ceiling

    kernel = functools.partial(gcn_fused_kernel, tm=TM,
                               adj_resident=adj_resident)

    out = pl.pallas_call(
        kernel,
        out_shape=jax.ShapeDtypeStruct((Np, Cp), jnp.float32),
        grid_spec=pltpu.PrefetchScalarGridSpec(
            num_scalar_prefetch=0,
            grid=(2, T),                                   # (layer, row tile)
            in_specs=[
                adj_spec,                                         # adjacency
                pl.BlockSpec((Np, Fin), lambda l, t: (0, 0)),     # x (resident)
                pl.BlockSpec((Np, 1), lambda l, t: (0, 0)),       # dinv (full)
                pl.BlockSpec((TM, 1), lambda l, t: (t, 0)),       # dinv rows
                pl.BlockSpec((Fin, Hp), lambda l, t: (0, 0)),     # w1
                pl.BlockSpec((1, Hp), lambda l, t: (0, 0)),       # b1
                pl.BlockSpec((Hp, Cp), lambda l, t: (0, 0)),      # w2
                pl.BlockSpec((1, Cp), lambda l, t: (0, 0)),       # b2
            ],
            # The output block index stays at 0 during layer 0 (where the
            # kernel never writes out_ref) and only advances during layer 1.
            # Pallas flushes an output block only when its block index changes
            # between steps, and (l=1, t=0) fully overwrites block 0 before any
            # such change, so only layer-1 results ever reach HBM.
            out_specs=pl.BlockSpec((TM, Cp), lambda l, t: (l * t, 0)),
            scratch_shapes=[
                pltpu.VMEM((Np, Hp), jnp.bfloat16),   # z1 = dinv*(X @ W1)
                pltpu.VMEM((Np, Cp), jnp.bfloat16),   # z2 = dinv*(H1 @ W2)
            ],
        ),
        # Row tiles write a shared z2 scratch consumed by layer 1, so both
        # grid axes must run sequentially on one core.
        compiler_params=pltpu.CompilerParams(
            dimension_semantics=("arbitrary", "arbitrary"),
            vmem_limit_bytes=vmem_limit),
    )(adj, xp, dinv, dinv, w1p, b1p, w2p, b2p)

    return out[:N, :C]


# ---------------------------------------------------------------------------
# Pure-JAX reference (PyG GCNConv semantics, eval mode), full f32.
# ---------------------------------------------------------------------------
def _gcn_ref(x, edge_index, params):
    N = x.shape[0]
    src, dst = edge_index[0], edge_index[1]
    adj = jnp.zeros((N, N), jnp.float32).at[dst, src].set(1.0)
    adj = adj.at[jnp.arange(N), jnp.arange(N)].set(1.0)
    deg = adj.sum(axis=1)
    dinv = 1.0 / jnp.sqrt(deg)
    a_hat = dinv[:, None] * adj * dinv[None, :]
    h = jnp.maximum(a_hat @ (x @ params["w1"]) + params["b1"], 0.0)
    # dropout: identity at inference
    return a_hat @ (h @ params["w2"]) + params["b2"]


if __name__ == "__main__":
    # Small shapes: N=16 nodes, in_channels=8, hidden_channels=32, out_channels=4
    N, Fin, H, C = 16, 8, 32, 4
    key = jax.random.PRNGKey(0)
    kx, kw1, kb1, kw2, kb2 = jax.random.split(key, 5)

    x = jax.random.normal(kx, (N, Fin), jnp.float32)

    # Bidirectional ring graph, edge_index shape (2, 2N) like PyG
    idx = jnp.arange(N, dtype=jnp.int32)
    edge_index = jnp.stack([jnp.concatenate([idx, (idx + 1) % N]),
                            jnp.concatenate([(idx + 1) % N, idx])], axis=0)

    # Parameters in "x @ W" orientation (GCNConv(Fin,H), GCNConv(H,C)).
    params = {
        "w1": 0.2 * jax.random.normal(kw1, (Fin, H), jnp.float32),
        "b1": 0.1 * jax.random.normal(kb1, (H,), jnp.float32),
        "w2": 0.2 * jax.random.normal(kw2, (H, C), jnp.float32),
        "b2": 0.1 * jax.random.normal(kb2, (C,), jnp.float32),
    }

    out = gcn_forward(x, edge_index, params)
    out = jax.block_until_ready(out)

    ref = _gcn_ref(x, edge_index, params)
    assert out.shape == (N, C)
    # bf16 aggregation path (z1/z2 stored bf16 pre-accumulation) -> tolerance
    # loosened vs the full-f32 reference; adjacency itself stays exact {0,1}.
    assert jnp.allclose(out, ref, atol=2e-2, rtol=2e-2), "mismatch vs reference"

    print("KERNEL_OK")
</pallas_src>

<mosaic_0001>
module attributes {stable_mosaic.version = 11 : i64} {
  func.func @gcn_fused_kernel(%arg0: i32, %arg1: i32, %arg2: memref<32x32xi8, #tpu.memory_space<vmem>>, %arg3: memref<32x8xf32, #tpu.memory_space<vmem>>, %arg4: memref<32x1xf32, #tpu.memory_space<vmem>>, %arg5: memref<32x1xf32, #tpu.memory_space<vmem>>, %arg6: memref<8x128xf32, #tpu.memory_space<vmem>>, %arg7: memref<1x128xf32, #tpu.memory_space<vmem>>, %arg8: memref<128x128xf32, #tpu.memory_space<vmem>>, %arg9: memref<1x128xf32, #tpu.memory_space<vmem>>, %arg10: memref<32x128xf32, #tpu.memory_space<vmem>>, %arg11: memref<32x128xbf16, #tpu.memory_space<vmem>>, %arg12: memref<32x128xbf16, #tpu.memory_space<vmem>>) attributes {dimension_semantics = [#tpu.dimension_semantics<arbitrary>, #tpu.dimension_semantics<arbitrary>], iteration_bounds = array<i64: 2, 1>, scalar_prefetch = 0 : i64, scratch_operands = 2 : i64, tpu.core_type = #tpu.core_type<tc>, window_params = [{pipeline_mode = #tpu.pipeline_mode<synchronous>, transform_indices = @transform_0, window_bounds = array<i64: 32, 32>}, {pipeline_mode = #tpu.pipeline_mode<synchronous>, transform_indices = @transform_1, window_bounds = array<i64: 32, 8>}, {pipeline_mode = #tpu.pipeline_mode<synchronous>, transform_indices = @transform_2, window_bounds = array<i64: 32, 1>}, {transform_indices = @transform_3, window_bounds = array<i64: 32, 1>}, {pipeline_mode = #tpu.pipeline_mode<synchronous>, transform_indices = @transform_4, window_bounds = array<i64: 8, 128>}, {pipeline_mode = #tpu.pipeline_mode<synchronous>, transform_indices = @transform_5, window_bounds = array<i64: 1, 128>}, {pipeline_mode = #tpu.pipeline_mode<synchronous>, transform_indices = @transform_6, window_bounds = array<i64: 128, 128>}, {pipeline_mode = #tpu.pipeline_mode<synchronous>, transform_indices = @transform_7, window_bounds = array<i64: 1, 128>}, {transform_indices = @transform_8, window_bounds = array<i64: 32, 128>}]} {
    %c32_i32 = arith.constant 32 : i32
    %0 = arith.muli %arg1, %c32_i32 : i32
    %1 = tpu.assume_multiple %0, 32 : i32
    %c0_i32 = arith.constant 0 : i32
    %2 = arith.cmpi eq, %arg0, %c0_i32 : i32
    %c0_i32_0 = arith.constant 0 : i32
    %3 = arith.cmpi eq, %arg1, %c0_i32_0 : i32
    %4 = arith.andi %2, %3 : i1
    %5 = arith.extui %4 : i1 to i32
    %c0_i32_1 = arith.constant 0 : i32
    %6 = arith.cmpi ne, %5, %c0_i32_1 : i32
    scf.if %6 {
      %c0_7 = arith.constant 0 : index
      %c0_8 = arith.constant 0 : index
      %17 = vector.load %arg4[%c0_7, %c0_8] : memref<32x1xf32, #tpu.memory_space<vmem>>, vector<32x1xf32>
      %c0_9 = arith.constant 0 : index
      %c0_10 = arith.constant 0 : index
      %18 = vector.load %arg3[%c0_9, %c0_10] : memref<32x8xf32, #tpu.memory_space<vmem>>, vector<32x8xf32>
      %c0_11 = arith.constant 0 : index
      %c0_12 = arith.constant 0 : index
      %19 = vector.load %arg6[%c0_11, %c0_12] : memref<8x128xf32, #tpu.memory_space<vmem>>, vector<8x128xf32>
      %cst = arith.constant dense<0.000000e+00> : vector<32x128xf32>
      %20 = tpu.matmul %18, %19, %cst {dimension_numbers = #tpu.dot_dimension_numbers<[1], [0], [0], [1], [0, 0, 1, 1], [], []>} : vector<32x8xf32>, vector<8x128xf32>, vector<32x128xf32> -> vector<32x128xf32>
      %21 = vector.broadcast %17 : vector<32x1xf32> to vector<32x128xf32>
      %22 = arith.mulf %21, %20 : vector<32x128xf32>
      %23 = arith.truncf %22 : vector<32x128xf32> to vector<32x128xbf16>
      %c0_13 = arith.constant 0 : index
      %c0_14 = arith.constant 0 : index
      %24 = vector.load %arg11[%c0_13, %c0_14] : memref<32x128xbf16, #tpu.memory_space<vmem>>, vector<32x128xbf16>
      tpu.vector_store %arg11[%c0_13, %c0_14], %23 {strides = array<i32>} : memref<32x128xbf16, #tpu.memory_space<vmem>>, vector<32x128xbf16>,
    } else {
    }
    %7 = arith.index_cast %1 : i32 to index
    %c0 = arith.constant 0 : index
    %8 = vector.load %arg2[%7, %c0] : memref<32x32xi8, #tpu.memory_space<vmem>>, vector<32x32xi8>
    %9 = arith.sitofp %8 : vector<32x32xi8> to vector<32x32xbf16>
    %c0_2 = arith.constant 0 : index
    %c0_3 = arith.constant 0 : index
    %10 = vector.load %arg5[%c0_2, %c0_3] : memref<32x1xf32, #tpu.memory_space<vmem>>, vector<32x1xf32>
    %c0_i32_4 = arith.constant 0 : i32
    %11 = arith.cmpi eq, %arg0, %c0_i32_4 : i32
    %12 = arith.extui %11 : i1 to i32
    %c0_i32_5 = arith.constant 0 : i32
    %13 = arith.cmpi ne, %12, %c0_i32_5 : i32
    scf.if %13 {
      %c0_7 = arith.constant 0 : index
      %c0_8 = arith.constant 0 : index
      %17 = vector.load %arg11[%c0_7, %c0_8] : memref<32x128xbf16, #tpu.memory_space<vmem>>, vector<32x128xbf16>
      %cst = arith.constant dense<0.000000e+00> : vector<32x128xf32>
      %18 = tpu.matmul %9, %17, %cst {dimension_numbers = #tpu.dot_dimension_numbers<[1], [0], [0], [1], [0, 0, 1, 1], [], []>} : vector<32x32xbf16>, vector<32x128xbf16>, vector<32x128xf32> -> vector<32x128xf32>
      %19 = vector.broadcast %10 : vector<32x1xf32> to vector<32x128xf32>
      %20 = arith.mulf %19, %18 : vector<32x128xf32>
      %c0_9 = arith.constant 0 : index
      %c0_10 = arith.constant 0 : index
      %21 = vector.load %arg7[%c0_9, %c0_10] : memref<1x128xf32, #tpu.memory_space<vmem>>, vector<1x128xf32>
      %22 = vector.broadcast %21 : vector<1x128xf32> to vector<32x128xf32>
      %23 = arith.addf %20, %22 : vector<32x128xf32>
      %cst_11 = arith.constant 0.000000e+00 : f32
      %24 = vector.broadcast %cst_11 : f32 to vector<32x128xf32>
      %25 = arith.maximumf %23, %24 : vector<32x128xf32>
      %c0_12 = arith.constant 0 : index
      %c0_13 = arith.constant 0 : index
      %26 = vector.load %arg8[%c0_12, %c0_13] : memref<128x128xf32, #tpu.memory_space<vmem>>, vector<128x128xf32>
      %cst_14 = arith.constant dense<0.000000e+00> : vector<32x128xf32>
      %27 = tpu.matmul %25, %26, %cst_14 {dimension_numbers = #tpu.dot_dimension_numbers<[1], [0], [0], [1], [0, 0, 1, 1], [], []>} : vector<32x128xf32>, vector<128x128xf32>, vector<32x128xf32> -> vector<32x128xf32>
      %28 = vector.broadcast %10 : vector<32x1xf32> to vector<32x128xf32>
      %29 = arith.mulf %28, %27 : vector<32x128xf32>
      %30 = arith.truncf %29 : vector<32x128xf32> to vector<32x128xbf16>
      %31 = arith.index_cast %1 : i32 to index
      %c0_15 = arith.constant 0 : index
      %32 = vector.load %arg12[%31, %c0_15] : memref<32x128xbf16, #tpu.memory_space<vmem>>, vector<32x128xbf16>
      tpu.vector_store %arg12[%31, %c0_15], %30 {strides = array<i32>} : memref<32x128xbf16, #tpu.memory_space<vmem>>, vector<32x128xbf16>,
    } else {
    }
    %c1_i32 = arith.constant 1 : i32
    %14 = arith.cmpi eq, %arg0, %c1_i32 : i32
    %15 = arith.extui %14 : i1 to i32
    %c0_i32_6 = arith.constant 0 : i32
    %16 = arith.cmpi ne, %15, %c0_i32_6 : i32
    scf.if %16 {
      %c0_7 = arith.constant 0 : index
      %c0_8 = arith.constant 0 : index
      %17 = vector.load %arg12[%c0_7, %c0_8] : memref<32x128xbf16, #tpu.memory_space<vmem>>, vector<32x128xbf16>
      %cst = arith.constant dense<0.000000e+00> : vector<32x128xf32>
      %18 = tpu.matmul %9, %17, %cst {dimension_numbers = #tpu.dot_dimension_numbers<[1], [0], [0], [1], [0, 0, 1, 1], [], []>} : vector<32x32xbf16>, vector<32x128xbf16>, vector<32x128xf32> -> vector<32x128xf32>
      %19 = vector.broadcast %10 : vector<32x1xf32> to vector<32x128xf32>
      %20 = arith.mulf %19, %18 : vector<32x128xf32>
      %c0_9 = arith.constant 0 : index
      %c0_10 = arith.constant 0 : index
      %21 = vector.load %arg9[%c0_9, %c0_10] : memref<1x128xf32, #tpu.memory_space<vmem>>, vector<1x128xf32>
      %22 = vector.broadcast %21 : vector<1x128xf32> to vector<32x128xf32>
      %23 = arith.addf %20, %22 : vector<32x128xf32>
      %c0_11 = arith.constant 0 : index
      %c0_12 = arith.constant 0 : index
      %24 = vector.load %arg10[%c0_11, %c0_12] : memref<32x128xf32, #tpu.memory_space<vmem>>, vector<32x128xf32>
      tpu.vector_store %arg10[%c0_11, %c0_12], %23 {strides = array<i32>} : memref<32x128xf32, #tpu.memory_space<vmem>>, vector<32x128xf32>,
    } else {
    }
    return
  }
  func.func @transform_0(%arg0: i32, %arg1: i32) -> (i32, i32) {
    %c0_i32 = arith.constant 0 : i32
    %c0_i32_0 = arith.constant 0 : i32
    %c0_i32_1 = arith.constant 0 : i32
    return %c0_i32, %c0_i32_0 : i32, i32
  }
  func.func @transform_1(%arg0: i32, %arg1: i32) -> (i32, i32) {
    %c0_i32 = arith.constant 0 : i32
    %c0_i32_0 = arith.constant 0 : i32
    %c0_i32_1 = arith.constant 0 : i32
    return %c0_i32, %c0_i32_0 : i32, i32
  }
  func.func @transform_2(%arg0: i32, %arg1: i32) -> (i32, i32) {
    %c0_i32 = arith.constant 0 : i32
    %c0_i32_0 = arith.constant 0 : i32
    %c0_i32_1 = arith.constant 0 : i32
    return %c0_i32, %c0_i32_0 : i32, i32
  }
  func.func @transform_3(%arg0: i32, %arg1: i32) -> (i32, i32) {
    %c0_i32 = arith.constant 0 : i32
    %c0_i32_0 = arith.constant 0 : i32
    return %arg1, %c0_i32 : i32, i32
  }
  func.func @transform_4(%arg0: i32, %arg1: i32) -> (i32, i32) {
    %c0_i32 = arith.constant 0 : i32
    %c0_i32_0 = arith.constant 0 : i32
    %c0_i32_1 = arith.constant 0 : i32
    return %c0_i32, %c0_i32_0 : i32, i32
  }
  func.func @transform_5(%arg0: i32, %arg1: i32) -> (i32, i32) {
    %c0_i32 = arith.constant 0 : i32
    %c0_i32_0 = arith.constant 0 : i32
    %c0_i32_1 = arith.constant 0 : i32
    return %c0_i32, %c0_i32_0 : i32, i32
  }
  func.func @transform_6(%arg0: i32, %arg1: i32) -> (i32, i32) {
    %c0_i32 = arith.constant 0 : i32
    %c0_i32_0 = arith.constant 0 : i32
    %c0_i32_1 = arith.constant 0 : i32
    return %c0_i32, %c0_i32_0 : i32, i32
  }
  func.func @transform_7(%arg0: i32, %arg1: i32) -> (i32, i32) {
    %c0_i32 = arith.constant 0 : i32
    %c0_i32_0 = arith.constant 0 : i32
    %c0_i32_1 = arith.constant 0 : i32
    return %c0_i32, %c0_i32_0 : i32, i32
  }
  func.func @transform_8(%arg0: i32, %arg1: i32) -> (i32, i32) {
    %0 = arith.muli %arg0, %arg1 : i32
    %c0_i32 = arith.constant 0 : i32
    %c0_i32_0 = arith.constant 0 : i32
    return %0, %c0_i32 : i32, i32
  }
}

</mosaic_0001>

<llo_original>
// kernel: tpu_custom_call.1
$region0: #{tpu_custom_call.1}
  #allocation0 [shape = 'u32[]', space=smem, size = 0x4, offset = 0x4, fixed_abs, tag = 'smem constant byte address 0x4 - core index']
  #allocation1 [shape = 'u32[144,128]{1,0:T(1,128)}', space=vmem, size = 0x12000, scoped, tag = 'internal scratch']
  #allocation2 [shape = 'bf16[32,128]{1,0:T(16,128)(2,1)}', space=vmem, size = 0x2000, scoped, tag = 'scratch operand']
  #allocation3 [shape = 'bf16[32,128]{1,0:T(16,128)(2,1)}', space=vmem, size = 0x2000, scoped, tag = 'scratch operand']
  %s0 = inlined_call_operand.hbm [shape: s8[32,32], index: 0, kind: input, shape index: {}]
  %s1 = inlined_call_operand.vmem [shape: f32[32,8], index: 1, kind: input, shape index: {}]
  %s2 = inlined_call_operand.vmem [shape: f32[32,1], index: 2, kind: input, shape index: {}]
  %s3 = inlined_call_operand.vmem [shape: f32[32,1], index: 3, kind: input, shape index: {}]
  %s4 = inlined_call_operand.hbm [shape: f32[8,128], index: 4, kind: input, shape index: {}]
  %s5 = inlined_call_operand.hbm [shape: f32[1,128], index: 5, kind: input, shape index: {}]
  %s6 = inlined_call_operand.vmem [shape: f32[128,128], index: 6, kind: input, shape index: {}]
  %s7 = inlined_call_operand.vmem [shape: f32[1,128], index: 7, kind: input, shape index: {}]
  %s8 = inlined_call_operand.hbm [shape: f32[32,128], index: 8, kind: output, shape index: {}]
  %s9 = sld [smem:[#allocation0]]
  $region89: #{tpu_custom_call.1} parent=0
    _
  %s11 = ssub.s32 1, %s9
  %s12 = scalar_select 0, %s11, %s9
  $region1: #{tpu_custom_call.1} parent=0
    #allocation4 [shape = 'u8[4096]{0}', space=vmem, size = 0x1000, scoped, tag = 'input window, operand 0, single buffered']
    #allocation5 [shape = 's32[2]{0}', space=sflag, size = 0x8, scoped, tag = 'scoped memory for tpu_custom_call.1']
    #allocation6 [shape = 's32[2]{0}', space=sflag, size = 0x8, scoped, tag = 'scoped memory for tpu_custom_call.1']
    #allocation7 [shape = 'u8[4096]{0}', space=vmem, size = 0x1000, scoped, tag = 'input window, operand 4, single buffered']
    #allocation8 [shape = 's32[1]{0}', space=sflag, size = 0x4, scoped, tag = 'scoped memory for tpu_custom_call.1']
    #allocation9 [shape = 'u8[512]{0}', space=vmem, size = 0x400, scoped, tag = 'input window, operand 5, single buffered']
    #allocation10 [shape = 'u8[32768]{0}', space=vmem, size = 0x8000, scoped, tag = 'output window, operand 0']
    %13 = vsyncpa [#allocation5], 0
    %14 = vsyncpa [#allocation8], 0
    %15 = vsyncpa [#allocation6], 0
    %s16 = scalar_lea.sflag [#allocation6], 1
    %17 = vsyncpa %s16, 0
    loop: start=0, step=1, limit=4
    $region2: #{tpu_custom_call.1} parent=1 // loop_pre_header
      _
    $region3: #{tpu_custom_call.1} parent=1 // loop_header
      %s19 = sphi 0, %s23
      %p20 = scmp.ge.s32.totalorder %s19, 4
      %s26 = sphi 0, %s38
      %s27 = sphi 0, %s34
      %s28 = sphi 0, %s26
      %s29 = sphi 0, %s27
      %s30 = sphi 0, %s28
      %s31 = sphi 0, %s29
      %s39 = sphi 0, %s39
      %s41 = sphi 0, %s39
      %s42 = sphi 0, %s41
      %s56 = sphi 0, %s42
      %s60 = sphi 0, %s60
      %s62 = sphi 0, %s60
      %s63 = sphi 0, %s62
      %s77 = sphi 0, %s63
      %s81 = sphi 0, %s81
      %s83 = sphi 0, %s81
      %s84 = sphi 0, %s83
      %s98 = sphi 0, %s84
      %s104 = sphi 0, %s106
      %s107 = sphi 0, %s104
      %s108 = sphi 0, %s107
      %s124 = sphi 0, %s108
      %s128 = sphi 0, %s128
      %s130 = sphi 0, %s128
      %s131 = sphi 0, %s130
      %s145 = sphi 0, %s131
      %s149 = sphi 0, %s149
      %s151 = sphi 0, %s149
      %s152 = sphi 0, %s151
      %s166 = sphi 0, %s152
      %s170 = sphi 0, %s170
      %s172 = sphi 0, %s170
      %s173 = sphi 0, %s172
      %s187 = sphi 0, %s173
      %s191 = sphi 0, %s191
      %s193 = sphi 0, %s191
      %s194 = sphi 0, %s193
      %s208 = sphi 0, %s194
      %s216 = sphi 0, %s218
      %s219 = sphi 0, %s216
      %s220 = sphi 0, %s219
      %s236 = sphi 0, %s220
    $region4: #{tpu_custom_call.1} parent=1 // loop_header_branch
      %22 = sbr.rel (%p20) target = $region8
    $region5: #{tpu_custom_call.1} parent=1 // loop_body
      %s24 = ssub.s32 %s19, 1
      %s25 = ssub.s32 %s19, 2
      %s32 = sadd.s32 1, %s27
      %p33 = scmp.ge.s32.totalorder %s32, 1
      %s34 = scalar_select %p33, 0, %s32
      %s35 = sadd.s32 1, %s26
      %s36 = scalar_select %p33, %s35, %s26
      %p37 = scmp.ge.s32.totalorder %s36, 2
      %s38 = scalar_select %p37, 0, %s36
      %s40 = sadd.s32 %s39, 1
      %p43 = scmp.eq.s32.totalorder %s19, 1
      %p44 = scmp.ne.s32.totalorder %s39, %s41
      %p45 = scmp.eq.s32.totalorder %s19, 0
      %p46 = por %p44, %p45
      %p47 = scmp.ne.s32.totalorder %s39, %s41
      %p48 = scmp.eq.s32.totalorder %s24, 1
      %p49 = por %p47, %p48
      %p50 = scmp.ne.s32.totalorder %s41, %s42
      %p51 = scmp.eq.s32.totalorder %s24, 0
      %p52 = por %p50, %p51
      %p53 = scmp.ne.s32.totalorder %s41, %s42
      %p54 = scmp.eq.s32.totalorder %s25, 1
      %p55 = por %p53, %p54
      %p57 = scmp.ne.s32.totalorder %s42, %s56
      %p58 = scmp.eq.s32.totalorder %s25, 0
      %p59 = por %p57, %p58
      %s61 = sadd.s32 %s60, 1
      %p64 = scmp.eq.s32.totalorder %s19, 1
      %p65 = scmp.ne.s32.totalorder %s60, %s62
      %p66 = scmp.eq.s32.totalorder %s19, 0
      %p67 = por %p65, %p66
      %p68 = scmp.ne.s32.totalorder %s60, %s62
      %p69 = scmp.eq.s32.totalorder %s24, 1
      %p70 = por %p68, %p69
      %p71 = scmp.ne.s32.totalorder %s62, %s63
      %p72 = scmp.eq.s32.totalorder %s24, 0
      %p73 = por %p71, %p72
      %p74 = scmp.ne.s32.totalorder %s62, %s63
      %p75 = scmp.eq.s32.totalorder %s25, 1
      %p76 = por %p74, %p75
      %p78 = scmp.ne.s32.totalorder %s63, %s77
      %p79 = scmp.eq.s32.totalorder %s25, 0
      %p80 = por %p78, %p79
      %s82 = sadd.s32 %s81, 1
      %p85 = scmp.eq.s32.totalorder %s19, 1
      %p86 = scmp.ne.s32.totalorder %s81, %s83
      %p87 = scmp.eq.s32.totalorder %s19, 0
      %p88 = por %p86, %p87
      %p89 = scmp.ne.s32.totalorder %s81, %s83
      %p90 = scmp.eq.s32.totalorder %s24, 1
      %p91 = por %p89, %p90
      %p92 = scmp.ne.s32.totalorder %s83, %s84
      %p93 = scmp.eq.s32.totalorder %s24, 0
      %p94 = por %p92, %p93
      %p95 = scmp.ne.s32.totalorder %s83, %s84
      %p96 = scmp.eq.s32.totalorder %s25, 1
      %p97 = por %p95, %p96
      %p99 = scmp.ne.s32.totalorder %s84, %s98
      %p100 = scmp.eq.s32.totalorder %s25, 0
      %p101 = por %p99, %p100
      %s102 = ssub.s32 %s27, %s34
      %p103 = scmp.eq.s32.totalorder %s102, 0
      %s105 = sadd.s32 %s104, 1
      %s106 = scalar_select %p103, %s104, %s105
      %p109 = pneg %p103
      %p110 = scmp.eq.s32.totalorder %s19, 1
      %p111 = por %p109, %p110
      %p112 = scmp.ne.s32.totalorder %s104, %s107
      %p113 = scmp.eq.s32.totalorder %s19, 0
      %p114 = por %p112, %p113
      %p115 = scmp.ne.s32.totalorder %s104, %s107
      %p116 = scmp.eq.s32.totalorder %s24, 1
      %p117 = por %p115, %p116
      %p118 = scmp.ne.s32.totalorder %s107, %s108
      %p119 = scmp.eq.s32.totalorder %s24, 0
      %p120 = por %p118, %p119
      %p121 = scmp.ne.s32.totalorder %s107, %s108
      %p122 = scmp.eq.s32.totalorder %s25, 1
      %p123 = por %p121, %p122
      %p125 = scmp.ne.s32.totalorder %s108, %s124
      %p126 = scmp.eq.s32.totalorder %s25, 0
      %p127 = por %p125, %p126
      %s129 = sadd.s32 %s128, 1
      %p132 = scmp.eq.s32.totalorder %s19, 1
      %p133 = scmp.ne.s32.totalorder %s128, %s130
      %p134 = scmp.eq.s32.totalorder %s19, 0
      %p135 = por %p133, %p134
      %p136 = scmp.ne.s32.totalorder %s128, %s130
      %p137 = scmp.eq.s32.totalorder %s24, 1
      %p138 = por %p136, %p137
      %p139 = scmp.ne.s32.totalorder %s130, %s131
      %p140 = scmp.eq.s32.totalorder %s24, 0
      %p141 = por %p139, %p140
      %p142 = scmp.ne.s32.totalorder %s130, %s131
      %p143 = scmp.eq.s32.totalorder %s25, 1
      %p144 = por %p142, %p143
      %p146 = scmp.ne.s32.totalorder %s131, %s145
      %p147 = scmp.eq.s32.totalorder %s25, 0
      %p148 = por %p146, %p147
      %s150 = sadd.s32 %s149, 1
      %p153 = scmp.eq.s32.totalorder %s19, 1
      %p154 = scmp.ne.s32.totalorder %s149, %s151
      %p155 = scmp.eq.s32.totalorder %s19, 0
      %p156 = por %p154, %p155
      %p157 = scmp.ne.s32.totalorder %s149, %s151
      %p158 = scmp.eq.s32.totalorder %s24, 1
      %p159 = por %p157, %p158
      %p160 = scmp.ne.s32.totalorder %s151, %s152
      %p161 = scmp.eq.s32.totalorder %s24, 0
      %p162 = por %p160, %p161
      %p163 = scmp.ne.s32.totalorder %s151, %s152
      %p164 = scmp.eq.s32.totalorder %s25, 1
      %p165 = por %p163, %p164
      %p167 = scmp.ne.s32.totalorder %s152, %s166
      %p168 = scmp.eq.s32.totalorder %s25, 0
      %p169 = por %p167, %p168
      %s171 = sadd.s32 %s170, 1
      %p174 = scmp.eq.s32.totalorder %s19, 1
      %p175 = scmp.ne.s32.totalorder %s170, %s172
      %p176 = scmp.eq.s32.totalorder %s19, 0
      %p177 = por %p175, %p176
      %p178 = scmp.ne.s32.totalorder %s170, %s172
      %p179 = scmp.eq.s32.totalorder %s24, 1
      %p180 = por %p178, %p179
      %p181 = scmp.ne.s32.totalorder %s172, %s173
      %p182 = scmp.eq.s32.totalorder %s24, 0
      %p183 = por %p181, %p182
      %p184 = scmp.ne.s32.totalorder %s172, %s173
      %p185 = scmp.eq.s32.totalorder %s25, 1
      %p186 = por %p184, %p185
      %p188 = scmp.ne.s32.totalorder %s173, %s187
      %p189 = scmp.eq.s32.totalorder %s25, 0
      %p190 = por %p188, %p189
      %s192 = sadd.s32 %s191, 1
      %p195 = scmp.eq.s32.totalorder %s19, 1
      %p196 = scmp.ne.s32.totalorder %s191, %s193
      %p197 = scmp.eq.s32.totalorder %s19, 0
      %p198 = por %p196, %p197
      %p199 = scmp.ne.s32.totalorder %s191, %s193
      %p200 = scmp.eq.s32.totalorder %s24, 1
      %p201 = por %p199, %p200
      %p202 = scmp.ne.s32.totalorder %s193, %s194
      %p203 = scmp.eq.s32.totalorder %s24, 0
      %p204 = por %p202, %p203
      %p205 = scmp.ne.s32.totalorder %s193, %s194
      %p206 = scmp.eq.s32.totalorder %s25, 1
      %p207 = por %p205, %p206
      %p209 = scmp.ne.s32.totalorder %s194, %s208
      %p210 = scmp.eq.s32.totalorder %s25, 0
      %p211 = por %p209, %p210
      %s212 = smul.u32 %s26, %s27
      %s213 = smul.u32 %s38, %s34
      %s214 = ssub.s32 %s212, %s213
      %p215 = scmp.eq.s32.totalorder %s214, 0
      %s217 = sadd.s32 %s216, 1
      %s218 = scalar_select %p215, %s216, %s217
      %p221 = pneg %p215
      %p222 = scmp.eq.s32.totalorder %s19, 1
      %p223 = por %p221, %p222
      %p224 = scmp.ne.s32.totalorder %s216, %s219
      %p225 = scmp.eq.s32.totalorder %s19, 0
      %p226 = por %p224, %p225
      %p227 = scmp.ne.s32.totalorder %s216, %s219
      %p228 = scmp.eq.s32.totalorder %s24, 1
      %p229 = por %p227, %p228
      %p230 = scmp.ne.s32.totalorder %s219, %s220
      %p231 = scmp.eq.s32.totalorder %s24, 0
      %p232 = por %p230, %p231
      %p233 = scmp.ne.s32.totalorder %s219, %s220
      %p234 = scmp.eq.s32.totalorder %s25, 1
      %p235 = por %p233, %p234
      %p237 = scmp.ne.s32.totalorder %s220, %s236
      %p238 = scmp.eq.s32.totalorder %s25, 0
      %p239 = por %p237, %p238
      %p240 = scmp.le.s32.totalorder 1, %s19
      %p241 = scmp.lt.s32.totalorder %s19, 3
      %p242 = pnand %p240, %p241
      %p243 = pneg %p242
      // Predicated region
      $region9: #{tpu_custom_call.1} parent=5 // pred_check
        _
      $region10: #{tpu_custom_call.1} parent=5 // pred_check_branch
        %245 = sbr.rel (%p242) target = $region12
      $region11: #{tpu_custom_call.1} parent=5 // pred_region
        %s246 = ssub.s32 %s19, 1
        // Predicated region
        $region13: #{tpu_custom_call.1} parent=11 // pred_check
          %p247 = pneg %p52
        $region14: #{tpu_custom_call.1} parent=11 // pred_check_branch
          %249 = sbr.rel (%p247) target = $region16
        $region15: #{tpu_custom_call.1} parent=11 // pred_region
          %s251 = ssub.s32 128, 128
          %252 = vsyncadd [#allocation5], %s251
          %s254 = sshll.u32 [#allocation4], 4
          %s255 = int_to_ptr.vmem [resolvable:$true] %s254
          %257 = dma.hbm_to_vmem [thread:$0]  %s0, 128, %s255, [#allocation5]
        $region16: #{tpu_custom_call.1} parent=11 // pred_fallthru
          _
        // Predicated region
        $region17: #{tpu_custom_call.1} parent=11 // pred_check
          %p258 = pneg %p73
        $region18: #{tpu_custom_call.1} parent=11 // pred_check_branch
          %260 = sbr.rel (%p258) target = $region20
        $region19: #{tpu_custom_call.1} parent=11 // pred_region
          _
        $region20: #{tpu_custom_call.1} parent=11 // pred_fallthru
          _
        // Predicated region
        $region21: #{tpu_custom_call.1} parent=11 // pred_check
          %p261 = pneg %p94
        $region22: #{tpu_custom_call.1} parent=11 // pred_check_branch
          %263 = sbr.rel (%p261) target = $region24
        $region23: #{tpu_custom_call.1} parent=11 // pred_region
          _
        $region24: #{tpu_custom_call.1} parent=11 // pred_fallthru
          _
        // Predicated region
        $region25: #{tpu_custom_call.1} parent=11 // pred_check
          %p264 = pneg %p120
        $region26: #{tpu_custom_call.1} parent=11 // pred_check_branch
          %266 = sbr.rel (%p264) target = $region28
        $region27: #{tpu_custom_call.1} parent=11 // pred_region
          %s267 = smul.u32 4, %s29
          %p268 = scmp.lt.s32.totalorder %s267, 3
          %s269 = scalar_select %p268, %s267, 3
          %s270 = smul.addr %s269, 8
          %s271 = scalar_lea.vmem %s3, %s270
          %s272 = smul.u32 4, %s29
        $region28: #{tpu_custom_call.1} parent=11 // pred_fallthru
          _
        // Predicated region
        $region29: #{tpu_custom_call.1} parent=11 // pred_check
          %p273 = pneg %p141
        $region30: #{tpu_custom_call.1} parent=11 // pred_check_branch
          %275 = sbr.rel (%p273) target = $region32
        $region31: #{tpu_custom_call.1} parent=11 // pred_region
          %s277 = ssub.s32 128, 128
          %278 = vsyncadd [#allocation8], %s277
          %s280 = sshll.u32 [#allocation7], 4
          %s281 = int_to_ptr.vmem [resolvable:$true] %s280
          %283 = dma.hbm_to_vmem [thread:$0]  %s4, 128, %s281, [#allocation8]
        $region32: #{tpu_custom_call.1} parent=11 // pred_fallthru
          _
        // Predicated region
        $region33: #{tpu_custom_call.1} parent=11 // pred_check
          %p284 = pneg %p162
        $region34: #{tpu_custom_call.1} parent=11 // pred_check_branch
          %286 = sbr.rel (%p284) target = $region36
        $region35: #{tpu_custom_call.1} parent=11 // pred_region
          %s288 = ssub.s32 16, 16
          %289 = vsyncadd [#allocation8], %s288
          %s291 = sshll.u32 [#allocation9], 4
          %s292 = int_to_ptr.vmem [resolvable:$true] %s291
          %294 = dma.hbm_to_vmem [thread:$0]  %s5, 16, %s292, [#allocation8]
        $region36: #{tpu_custom_call.1} parent=11 // pred_fallthru
          _
        // Predicated region
        $region37: #{tpu_custom_call.1} parent=11 // pred_check
          %p295 = pneg %p183
        $region38: #{tpu_custom_call.1} parent=11 // pred_check_branch
          %297 = sbr.rel (%p295) target = $region40
        $region39: #{tpu_custom_call.1} parent=11 // pred_region
          _
        $region40: #{tpu_custom_call.1} parent=11 // pred_fallthru
          _
        // Predicated region
        $region41: #{tpu_custom_call.1} parent=11 // pred_check
          %p298 = pneg %p204
        $region42: #{tpu_custom_call.1} parent=11 // pred_check_branch
          %300 = sbr.rel (%p298) target = $region44
        $region43: #{tpu_custom_call.1} parent=11 // pred_region
          _
        $region44: #{tpu_custom_call.1} parent=11 // pred_fallthru
          _
      $region12: #{tpu_custom_call.1} parent=5 // pred_fallthru
        _
      %p301 = scmp.lt.s32.totalorder %s19, 2
      // Predicated region
      $region45: #{tpu_custom_call.1} parent=5 // pred_check
        %p302 = pneg %p301
      $region46: #{tpu_custom_call.1} parent=5 // pred_check_branch
        %304 = sbr.rel (%p302) target = $region48
      $region47: #{tpu_custom_call.1} parent=5 // pred_region
        _
      $region48: #{tpu_custom_call.1} parent=5 // pred_fallthru
        _
      %p305 = scmp.le.s32.totalorder 1, %s19
      %p306 = scmp.lt.s32.totalorder %s19, 3
      %p307 = pnand %p305, %p306
      %p308 = pneg %p307
      // Predicated region
      $region49: #{tpu_custom_call.1} parent=5 // pred_check
        _
      $region50: #{tpu_custom_call.1} parent=5 // pred_check_branch
        %310 = sbr.rel (%p307) target = $region52
      $region51: #{tpu_custom_call.1} parent=5 // pred_region
        %s311 = ssub.s32 %s19, 1
        // Predicated region
        $region53: #{tpu_custom_call.1} parent=51 // pred_check
          %p312 = pneg %p52
        $region54: #{tpu_custom_call.1} parent=51 // pred_check_branch
          %314 = sbr.rel (%p312) target = $region56
        $region55: #{tpu_custom_call.1} parent=51 // pred_region
          %315 = dma.done [#allocation5], 128
        $region56: #{tpu_custom_call.1} parent=51 // pred_fallthru
          _
        // Predicated region
        $region57: #{tpu_custom_call.1} parent=51 // pred_check
          %p316 = pneg %p141
        $region58: #{tpu_custom_call.1} parent=51 // pred_check_branch
          %318 = sbr.rel (%p316) target = $region60
        $region59: #{tpu_custom_call.1} parent=51 // pred_region
          %319 = dma.done [#allocation8], 128
        $region60: #{tpu_custom_call.1} parent=51 // pred_fallthru
          _
        // Predicated region
        $region61: #{tpu_custom_call.1} parent=51 // pred_check
          %p320 = pneg %p162
        $region62: #{tpu_custom_call.1} parent=51 // pred_check_branch
          %322 = sbr.rel (%p320) target = $region64
        $region63: #{tpu_custom_call.1} parent=51 // pred_region
          %323 = dma.done [#allocation8], 16
        $region64: #{tpu_custom_call.1} parent=51 // pred_fallthru
          _
        %p324 = pneg %p52
        %p325 = pneg %p49
        %p326 = pneg %p73
        %p327 = pneg %p70
        %p328 = pneg %p94
        %p329 = pneg %p91
        %s330 = smul.u32 4, %s29
        %p331 = scmp.lt.s32.totalorder %s330, 3
        %s332 = scalar_select %p331, %s330, 3
        %s333 = smul.addr %s332, 8
        %s334 = scalar_lea.vmem %s3, %s333
        %p335 = pneg %p120
        %p336 = pneg %p117
        %p337 = pneg %p141
        %p338 = pneg %p138
        %p339 = pneg %p162
        %p340 = pneg %p159
        %p341 = pneg %p183
        %p342 = pneg %p180
        %p343 = pneg %p204
        %p344 = pneg %p201
        %p345 = pneg %p232
        %p346 = pneg %p229
        %s347 = sand.u32 %s219, 1
        %s348 = scalar_lea.sflag [#allocation6], %s347
        %s349 = sand.u32 %s219, 1
        %s350 = smul.addr %s349, 32
        %s351 = scalar_lea.vmem [#allocation10], %s350
        %s352 = smul.u32 4, %s29
        %p353 = scmp.lt.s32.totalorder %s352, 3
        %s354 = scalar_select %p353, %s352, 3
        %s355 = smul.addr %s354, 8
        %s356 = scalar_lea.vmem %s3, %s355
        %s357 = smul.u32 4, %s29
        %s358 = smul.u32 %s28, %s29
        %s359 = smul.u32 4, %s358
        %s361 = smul.u32 %s29, 32
        %p362 = scmp.eq.s32.totalorder %s28, 0
        %p363 = scmp.eq.s32.totalorder %s29, 0
        %p364 = pnand %p362, %p363
        %p365 = pneg %p364
        // Predicated region
        $region65: #{tpu_custom_call.1} parent=51 // pred_check
          _
        $region66: #{tpu_custom_call.1} parent=51 // pred_check_branch
          %367 = sbr.rel (%p364) target = $region68
        $region67: #{tpu_custom_call.1} parent=51 // pred_region
          %v368 = vld [vmem:[%s2] sm:$0xff]
          %v369 = vld [vmem:[%s2 + $0x8] sm:$0xff]
          %v370 = vld [vmem:[%s2 + $0x10] sm:$0xff]
          %v371 = vld [vmem:[%s2 + $0x18] sm:$0xff]
          %v372 = vld [vmem:[%s1] sm:$0xff]
          %v373 = vld [vmem:[%s1 + $0x8] sm:$0xff]
          %v374 = vld [vmem:[%s1 + $0x10] sm:$0xff]
          %v375 = vld [vmem:[%s1 + $0x18] sm:$0xff]
          %v376 = vld [vmem:[#allocation7] sm:$0xff]
          %vm377 = vcmask 64512
          %v379 = vsel %vm377, %v372, 0
          %v382 = vsel %vm377, %v373, 0
          %v385 = vsel %vm377, %v374, 0
          %v388 = vsel %vm377, %v375, 0
          %390 = vmatprep.subr.mxu0 0.0
          %391 = vmatpush1.msra.mxu0 %v376
          %392 = vmatprep.subr.mxu0 0.0
          %393 = vmatpush1.msra.mxu0 0.0
          %394 = vmatprep.subr.mxu0 0.0
          %395 = vmatpush1.msra.mxu0 0.0
          %396 = vmatprep.subr.mxu0 0.0
          %397 = vmatpush1.msra.mxu0 0.0
          %398 = vmatprep.subr.mxu0 0.0
          %399 = vmatpush1.msra.mxu0 0.0
          %400 = vmatprep.subr.mxu0 0.0
          %401 = vmatpush1.msra.mxu0 0.0
          %402 = vmatprep.subr.mxu0 0.0
          %403 = vmatpush1.msra.mxu0 0.0
          %404 = vmatprep.subr.mxu0 0.0
          %405 = vmatpush1.msra.mxu0 0.0
          %406 = vmatprep.subr.mxu0 0.0
          %407 = vmatpush1.msra.mxu0 0.0
          %408 = vmatprep.subr.mxu0 0.0
          %409 = vmatpush1.msra.mxu0 0.0
          %410 = vmatprep.subr.mxu0 0.0
          %411 = vmatpush1.msra.mxu0 0.0
          %412 = vmatprep.subr.mxu0 0.0
          %413 = vmatpush1.msra.mxu0 0.0
          %414 = vmatprep.subr.mxu0 0.0
          %415 = vmatpush1.msra.mxu0 0.0
          %416 = vmatprep.subr.mxu0 0.0
          %417 = vmatpush1.msra.mxu0 0.0
          %418 = vmatprep.subr.mxu0 0.0
          %419 = vmatpush1.msra.mxu0 0.0
          %420 = vmatprep.subr.mxu0 0.0
          %421 = vmatpush1.msra.mxu0 0.0
          %422 = vmatprep.subr.mxu0 0.0
          %423 = vmatpush1.msra.mxu0 0.0
          %424 = vmatprep.subr.mxu0 0.0
          %425 = vmatpush1.msra.mxu0 0.0
          %426 = vmatprep.subr.mxu0 0.0
          %427 = vmatpush1.msra.mxu0 0.0
          %428 = vmatprep.subr.mxu0 0.0
          %429 = vmatpush1.msra.mxu0 0.0
          %430 = vmatprep.subr.mxu0 0.0
          %431 = vmatpush1.msra.mxu0 0.0
          %432 = vmatprep.subr.mxu0 0.0
          %433 = vmatpush1.msra.mxu0 0.0
          %434 = vmatprep.subr.mxu0 0.0
          %435 = vmatpush1.msra.mxu0 0.0
          %436 = vmatprep.subr.mxu0 0.0
          %437 = vmatpush1.msra.mxu0 0.0
          %438 = vmatprep.subr.mxu0 0.0
          %439 = vmatpush1.msra.mxu0 0.0
          %440 = vmatprep.subr.mxu0 0.0
          %441 = vmatpush1.msra.mxu0 0.0
          %442 = vmatprep.subr.mxu0 0.0
          %443 = vmatpush1.msra.mxu0 0.0
          %444 = vmatprep.subr.mxu0 0.0
          %445 = vmatpush1.msra.mxu0 0.0
          %446 = vmatprep.subr.mxu0 0.0
          %447 = vmatpush1.msra.mxu0 0.0
          %448 = vmatprep.subr.mxu0 0.0
          %449 = vmatpush1.msra.mxu0 0.0
          %450 = vmatprep.subr.mxu0 0.0
          %451 = vmatpush1.msra.mxu0 0.0
          %452 = vmatprep.subr.mxu0 0.0
          %453 = vmatpush1.msra.mxu0 0.0
          %454 = vmatprep.mubr.f32.mxu0 0.0
          %455 = vmatmul.mubr.f32.gmra.mrb[0].mxu0 %v379
          %v456 = vpop.f32.mrb[0].mxu0
          %v457 = vadd.f32 0.0, %v456
          %v458 = vpop.f32.mrb[0].mxu0
          %459 = vmatprep.mubr.f32.mxu0 0.0
          %460 = vmatmul.mubr.f32.gmra.mrb[0].mxu0 %v382
          %v461 = vpop.f32.mrb[0].mxu0
          %v462 = vadd.f32 0.0, %v461
          %v463 = vpop.f32.mrb[0].mxu0
          %464 = vmatprep.mubr.f32.mxu0 0.0
          %465 = vmatmul.mubr.f32.gmra.mrb[0].mxu0 %v385
          %v466 = vpop.f32.mrb[0].mxu0
          %v467 = vadd.f32 0.0, %v466
          %v468 = vpop.f32.mrb[0].mxu0
          %469 = vmatprep.mubr.f32.mxu0 0.0
          %470 = vmatmul.mubr.f32.gmra.mrb[0].mxu0 %v388
          %v471 = vpop.f32.mrb[0].mxu0
          %v472 = vadd.f32 0.0, %v471
          %v473 = vpop.f32.mrb[0].mxu0
          %474 = vdwg.mxu0
          %476 = vset.pattern.permute.xlu0 0
          %477 = vperm.xlu0 %476, %v368
          %v478 = vpop.permute.xlu0 %477
          %481 = vset.pattern.permute.xlu0 0
          %482 = vperm.xlu0 %481, %v369
          %v483 = vpop.permute.xlu0 %482
          %486 = vset.pattern.permute.xlu0 0
          %487 = vperm.xlu0 %486, %v370
          %v488 = vpop.permute.xlu0 %487
          %491 = vset.pattern.permute.xlu0 0
          %492 = vperm.xlu0 %491, %v371
          %v493 = vpop.permute.xlu0 %492
          %v495 = vmul.f32 %v478, %v457
          %v496 = vmul.f32 %v483, %v462
          %v497 = vmul.f32 %v488, %v467
          %v498 = vmul.f32 %v493, %v472
          %v499 = vpack.c.bf16 %v496, %v495
          %v500 = vpack.c.bf16 %v498, %v497
          %501 = vst [vmem:[#allocation2] sm:$0xff] %v499
          %502 = vst [vmem:[#allocation2 + $0x8] sm:$0xff] %v500
        $region68: #{tpu_custom_call.1} parent=51 // pred_fallthru
          _
        %s503 = sshra.s32 %s361, 5
        %s504 = sand.u32 %s361, 31
        %s505 = smul.addr %s503, 8
        %s506 = scalar_lea.vmem [#allocation4], %s505
        %v507 = vld [vmem:[%s506] sm:$0xff]
        %v508 = vunpack.c.l.s8.bf16 %v507
        %v509 = vunpack.c.h.s8.bf16 %v507
        %v510 = vld [vmem:[%s356] sm:$0xff]
        %v511 = vld [vmem:[%s356 + $0x8] sm:$0xff]
        %v512 = vld [vmem:[%s356 + $0x10] sm:$0xff]
        %v513 = vld [vmem:[%s356 + $0x18] sm:$0xff]
        // Predicated region
        $region69: #{tpu_custom_call.1} parent=51 // pred_check
          %p514 = pneg %p362
        $region70: #{tpu_custom_call.1} parent=51 // pred_check_branch
          %516 = sbr.rel (%p514) target = $region72
        $region71: #{tpu_custom_call.1} parent=51 // pred_region
          %v517 = vld [vmem:[#allocation2] sm:$0xff]
          %v518 = vld [vmem:[#allocation2 + $0x8] sm:$0xff]
          %vm519 = vcmask 261120
          %v521 = vsel %vm519, %v508, 0
          %v524 = vsel %vm519, %v509, 0
          %526 = vmatprep.subr.bf16.mxu0 0
          %527 = vmatpush1.bf16.msra.mxu0 %v517
          %528 = vmatprep.subr.bf16.mxu0 0
          %529 = vmatpush1.bf16.msra.mxu0 %v518
          %530 = vmatprep.subr.bf16.mxu0 0
          %531 = vmatpush1.bf16.msra.mxu0 0
          %532 = vmatprep.subr.bf16.mxu0 0
          %533 = vmatpush1.bf16.msra.mxu0 0
          %534 = vmatprep.subr.bf16.mxu0 0
          %535 = vmatpush1.bf16.msra.mxu0 0
          %536 = vmatprep.subr.bf16.mxu0 0
          %537 = vmatpush1.bf16.msra.mxu0 0
          %538 = vmatprep.subr.bf16.mxu0 0
          %539 = vmatpush1.bf16.msra.mxu0 0
          %540 = vmatprep.subr.bf16.mxu0 0
          %541 = vmatpush1.bf16.msra.mxu0 0
          %542 = vmatprep.subr.bf16.mxu0 0
          %543 = vmatpush1.bf16.msra.mxu0 0
          %544 = vmatprep.subr.bf16.mxu0 0
          %545 = vmatpush1.bf16.msra.mxu0 0
          %546 = vmatprep.subr.bf16.mxu0 0
          %547 = vmatpush1.bf16.msra.mxu0 0
          %548 = vmatprep.subr.bf16.mxu0 0
          %549 = vmatpush1.bf16.msra.mxu0 0
          %550 = vmatprep.subr.bf16.mxu0 0
          %551 = vmatpush1.bf16.msra.mxu0 0
          %552 = vmatprep.subr.bf16.mxu0 0
          %553 = vmatpush1.bf16.msra.mxu0 0
          %554 = vmatprep.subr.bf16.mxu0 0
          %555 = vmatpush1.bf16.msra.mxu0 0
          %556 = vmatprep.subr.bf16.mxu0 0
          %557 = vmatpush1.bf16.msra.mxu0 0
          %558 = vmatprep.mubr.bf16.mxu0 0
          %559 = vmatmul.mubr.bf16.gmra.mrb[0].mxu0 %v521
          %v560 = vpop.f32.mrb[0].mxu0
          %v561 = vadd.f32 0.0, %v560
          %v562 = vpop.f32.mrb[0].mxu0
          %v563 = vpop.f32.mrb[0].mxu0
          %v564 = vadd.f32 0.0, %v563
          %v565 = vpop.f32.mrb[0].mxu0
          %566 = vmatprep.mubr.bf16.mxu0 0
          %567 = vmatmul.mubr.bf16.gmra.mrb[0].mxu0 %v524
          %v568 = vpop.f32.mrb[0].mxu0
          %v569 = vadd.f32 0.0, %v568
          %v570 = vpop.f32.mrb[0].mxu0
          %v571 = vpop.f32.mrb[0].mxu0
          %v572 = vadd.f32 0.0, %v571
          %v573 = vpop.f32.mrb[0].mxu0
          %574 = vdwg.mxu0
          %576 = vset.pattern.permute.xlu0 0
          %577 = vperm.xlu0 %576, %v510
          %v578 = vpop.permute.xlu0 %577
          %581 = vset.pattern.permute.xlu0 0
          %582 = vperm.xlu0 %581, %v511
          %v583 = vpop.permute.xlu0 %582
          %586 = vset.pattern.permute.xlu0 0
          %587 = vperm.xlu0 %586, %v512
          %v588 = vpop.permute.xlu0 %587
          %591 = vset.pattern.permute.xlu0 0
          %592 = vperm.xlu0 %591, %v513
          %v593 = vpop.permute.xlu0 %592
          %v595 = vmul.f32 %v578, %v561
          %v596 = vmul.f32 %v583, %v564
          %v597 = vmul.f32 %v588, %v569
          %v598 = vmul.f32 %v593, %v572
          %v599 = vld [vmem:[#allocation9] sm:$0x1]
          %v601 = vlaneseq
          %v602 = vshrl.u32 %v601, 7
          %v603 = vsub.s32 0, %v602
          %v604 = vrot.slane %v599, %v603
          %v606 = vadd.f32 %v595, %v604
          %v607 = vadd.f32 %v596, %v604
          %v608 = vadd.f32 %v597, %v604
          %v609 = vadd.f32 %v598, %v604
          %v610 = vmax.f32 %v606, 0.0
          %v611 = vmax.f32 %v607, 0.0
          %v612 = vmax.f32 %v608, 0.0
          %v613 = vmax.f32 %v609, 0.0
          %v614 = vld [vmem:[%s6] sm:$0xff]
          %v615 = vld [vmem:[%s6 + $0x8] sm:$0xff]
          %v616 = vld [vmem:[%s6 + $0x10] sm:$0xff]
          %v617 = vld [vmem:[%s6 + $0x18] sm:$0xff]
          %v618 = vld [vmem:[%s6 + $0x20] sm:$0xff]
          %v619 = vld [vmem:[%s6 + $0x28] sm:$0xff]
          %v620 = vld [vmem:[%s6 + $0x30] sm:$0xff]
          %v621 = vld [vmem:[%s6 + $0x38] sm:$0xff]
          %v622 = vld [vmem:[%s6 + $0x40] sm:$0xff]
          %v623 = vld [vmem:[%s6 + $0x48] sm:$0xff]
          %v624 = vld [vmem:[%s6 + $0x50] sm:$0xff]
          %v625 = vld [vmem:[%s6 + $0x58] sm:$0xff]
          %v626 = vld [vmem:[%s6 + $0x60] sm:$0xff]
          %v627 = vld [vmem:[%s6 + $0x68] sm:$0xff]
          %v628 = vld [vmem:[%s6 + $0x70] sm:$0xff]
          %v629 = vld [vmem:[%s6 + $0x78] sm:$0xff]
          %630 = vmatprep.subr.mxu0 0.0
          %631 = vmatpush1.msra.mxu0 %v614
          %632 = vmatprep.subr.mxu0 0.0
          %633 = vmatpush1.msra.mxu0 %v615
          %634 = vmatprep.subr.mxu0 0.0
          %635 = vmatpush1.msra.mxu0 %v616
          %636 = vmatprep.subr.mxu0 0.0
          %637 = vmatpush1.msra.mxu0 %v617
          %638 = vmatprep.subr.mxu0 0.0
          %639 = vmatpush1.msra.mxu0 %v618
          %640 = vmatprep.subr.mxu0 0.0
          %641 = vmatpush1.msra.mxu0 %v619
          %642 = vmatprep.subr.mxu0 0.0
          %643 = vmatpush1.msra.mxu0 %v620
          %644 = vmatprep.subr.mxu0 0.0
          %645 = vmatpush1.msra.mxu0 %v621
          %646 = vmatprep.subr.mxu0 0.0
          %647 = vmatpush1.msra.mxu0 %v622
          %648 = vmatprep.subr.mxu0 0.0
          %649 = vmatpush1.msra.mxu0 %v623
          %650 = vmatprep.subr.mxu0 0.0
          %651 = vmatpush1.msra.mxu0 %v624
          %652 = vmatprep.subr.mxu0 0.0
          %653 = vmatpush1.msra.mxu0 %v625
          %654 = vmatprep.subr.mxu0 0.0
          %655 = vmatpush1.msra.mxu0 %v626
          %656 = vmatprep.subr.mxu0 0.0
          %657 = vmatpush1.msra.mxu0 %v627
          %658 = vmatprep.subr.mxu0 0.0
          %659 = vmatpush1.msra.mxu0 %v628
          %660 = vmatprep.subr.mxu0 0.0
          %661 = vmatpush1.msra.mxu0 %v629
          %662 = vmatprep.subr.mxu0 0.0
          %663 = vmatpush1.msra.mxu0 0.0
          %664 = vmatprep.subr.mxu0 0.0
          %665 = vmatpush1.msra.mxu0 0.0
          %666 = vmatprep.subr.mxu0 0.0
          %667 = vmatpush1.msra.mxu0 0.0
          %668 = vmatprep.subr.mxu0 0.0
          %669 = vmatpush1.msra.mxu0 0.0
          %670 = vmatprep.subr.mxu0 0.0
          %671 = vmatpush1.msra.mxu0 0.0
          %672 = vmatprep.subr.mxu0 0.0
          %673 = vmatpush1.msra.mxu0 0.0
          %674 = vmatprep.subr.mxu0 0.0
          %675 = vmatpush1.msra.mxu0 0.0
          %676 = vmatprep.subr.mxu0 0.0
          %677 = vmatpush1.msra.mxu0 0.0
          %678 = vmatprep.subr.mxu0 0.0
          %679 = vmatpush1.msra.mxu0 0.0
          %680 = vmatprep.subr.mxu0 0.0
          %681 = vmatpush1.msra.mxu0 0.0
          %682 = vmatprep.subr.mxu0 0.0
          %683 = vmatpush1.msra.mxu0 0.0
          %684 = vmatprep.subr.mxu0 0.0
          %685 = vmatpush1.msra.mxu0 0.0
          %686 = vmatprep.subr.mxu0 0.0
          %687 = vmatpush1.msra.mxu0 0.0
          %688 = vmatprep.subr.mxu0 0.0
          %689 = vmatpush1.msra.mxu0 0.0
          %690 = vmatprep.subr.mxu0 0.0
          %691 = vmatpush1.msra.mxu0 0.0
          %692 = vmatprep.subr.mxu0 0.0
          %693 = vmatpush1.msra.mxu0 0.0
          %694 = vmatprep.mubr.f32.mxu0 0.0
          %695 = vmatmul.mubr.f32.gmra.mrb[0].mxu0 %v610
          %v696 = vpop.f32.mrb[0].mxu0
          %v697 = vadd.f32 0.0, %v696
          %v698 = vpop.f32.mrb[0].mxu0
          %699 = vmatprep.mubr.f32.mxu0 0.0
          %700 = vmatmul.mubr.f32.gmra.mrb[0].mxu0 %v611
          %v701 = vpop.f32.mrb[0].mxu0
          %v702 = vadd.f32 0.0, %v701
          %v703 = vpop.f32.mrb[0].mxu0
          %704 = vmatprep.mubr.f32.mxu0 0.0
          %705 = vmatmul.mubr.f32.gmra.mrb[0].mxu0 %v612
          %v706 = vpop.f32.mrb[0].mxu0
          %v707 = vadd.f32 0.0, %v706
          %v708 = vpop.f32.mrb[0].mxu0
          %709 = vmatprep.mubr.f32.mxu0 0.0
          %710 = vmatmul.mubr.f32.gmra.mrb[0].mxu0 %v613
          %v711 = vpop.f32.mrb[0].mxu0
          %v712 = vadd.f32 0.0, %v711
          %v713 = vpop.f32.mrb[0].mxu0
          %714 = vdwg.mxu0
          %v715 = vmul.f32 %v578, %v697
          %v716 = vmul.f32 %v583, %v702
          %v717 = vmul.f32 %v588, %v707
          %v718 = vmul.f32 %v593, %v712
          %v719 = vpack.c.bf16 %v716, %v715
          %v720 = vpack.c.bf16 %v718, %v717
          %s721 = sshra.s32 %s361, 4
          %s722 = sand.u32 %s361, 15
          %s723 = smul.addr %s721, 8
          %s724 = scalar_lea.vmem [#allocation3], %s723
          %725 = vst [vmem:[%s724] sm:$0xff] %v719
          %726 = vst [vmem:[%s724 + $0x8] sm:$0xff] %v720
        $region72: #{tpu_custom_call.1} parent=51 // pred_fallthru
          _
        %p727 = scmp.eq.s32.totalorder %s28, 1
        // Predicated region
        $region73: #{tpu_custom_call.1} parent=51 // pred_check
          %p728 = pneg %p727
        $region74: #{tpu_custom_call.1} parent=51 // pred_check_branch
          %730 = sbr.rel (%p728) target = $region76
        $region75: #{tpu_custom_call.1} parent=51 // pred_region
          %v731 = vld [vmem:[#allocation3] sm:$0xff]
          %v732 = vld [vmem:[#allocation3 + $0x8] sm:$0xff]
          %vm733 = vcmask 261120
          %v735 = vsel %vm733, %v508, 0
          %v738 = vsel %vm733, %v509, 0
          %740 = vmatprep.subr.bf16.mxu0 0
          %741 = vmatpush1.bf16.msra.mxu0 %v731
          %742 = vmatprep.subr.bf16.mxu0 0
          %743 = vmatpush1.bf16.msra.mxu0 %v732
          %744 = vmatprep.subr.bf16.mxu0 0
          %745 = vmatpush1.bf16.msra.mxu0 0
          %746 = vmatprep.subr.bf16.mxu0 0
          %747 = vmatpush1.bf16.msra.mxu0 0
          %748 = vmatprep.subr.bf16.mxu0 0
          %749 = vmatpush1.bf16.msra.mxu0 0
          %750 = vmatprep.subr.bf16.mxu0 0
          %751 = vmatpush1.bf16.msra.mxu0 0
          %752 = vmatprep.subr.bf16.mxu0 0
          %753 = vmatpush1.bf16.msra.mxu0 0
          %754 = vmatprep.subr.bf16.mxu0 0
          %755 = vmatpush1.bf16.msra.mxu0 0
          %756 = vmatprep.subr.bf16.mxu0 0
          %757 = vmatpush1.bf16.msra.mxu0 0
          %758 = vmatprep.subr.bf16.mxu0 0
          %759 = vmatpush1.bf16.msra.mxu0 0
          %760 = vmatprep.subr.bf16.mxu0 0
          %761 = vmatpush1.bf16.msra.mxu0 0
          %762 = vmatprep.subr.bf16.mxu0 0
          %763 = vmatpush1.bf16.msra.mxu0 0
          %764 = vmatprep.subr.bf16.mxu0 0
          %765 = vmatpush1.bf16.msra.mxu0 0
          %766 = vmatprep.subr.bf16.mxu0 0
          %767 = vmatpush1.bf16.msra.mxu0 0
          %768 = vmatprep.subr.bf16.mxu0 0
          %769 = vmatpush1.bf16.msra.mxu0 0
          %770 = vmatprep.subr.bf16.mxu0 0
          %771 = vmatpush1.bf16.msra.mxu0 0
          %772 = vmatprep.mubr.bf16.mxu0 0
          %773 = vmatmul.mubr.bf16.gmra.mrb[0].mxu0 %v735
          %v774 = vpop.f32.mrb[0].mxu0
          %v775 = vadd.f32 0.0, %v774
          %v776 = vpop.f32.mrb[0].mxu0
          %v777 = vpop.f32.mrb[0].mxu0
          %v778 = vadd.f32 0.0, %v777
          %v779 = vpop.f32.mrb[0].mxu0
          %780 = vmatprep.mubr.bf16.mxu0 0
          %781 = vmatmul.mubr.bf16.gmra.mrb[0].mxu0 %v738
          %v782 = vpop.f32.mrb[0].mxu0
          %v783 = vadd.f32 0.0, %v782
          %v784 = vpop.f32.mrb[0].mxu0
          %v785 = vpop.f32.mrb[0].mxu0
          %v786 = vadd.f32 0.0, %v785
          %v787 = vpop.f32.mrb[0].mxu0
          %788 = vdwg.mxu0
          %790 = vset.pattern.permute.xlu0 0
          %791 = vperm.xlu0 %790, %v510
          %v792 = vpop.permute.xlu0 %791
          %795 = vset.pattern.permute.xlu0 0
          %796 = vperm.xlu0 %795, %v511
          %v797 = vpop.permute.xlu0 %796
          %800 = vset.pattern.permute.xlu0 0
          %801 = vperm.xlu0 %800, %v512
          %v802 = vpop.permute.xlu0 %801
          %805 = vset.pattern.permute.xlu0 0
          %806 = vperm.xlu0 %805, %v513
          %v807 = vpop.permute.xlu0 %806
          %v809 = vmul.f32 %v792, %v775
          %v810 = vmul.f32 %v797, %v778
          %v811 = vmul.f32 %v802, %v783
          %v812 = vmul.f32 %v807, %v786
          %v813 = vld [vmem:[%s7] sm:$0x1]
          %v815 = vlaneseq
          %v816 = vshrl.u32 %v815, 7
          %v817 = vsub.s32 0, %v816
          %v818 = vrot.slane %v813, %v817
          %v820 = vadd.f32 %v809, %v818
          %v821 = vadd.f32 %v810, %v818
          %v822 = vadd.f32 %v811, %v818
          %v823 = vadd.f32 %v812, %v818
          %824 = vst [vmem:[%s351] sm:$0xff] %v820
          %825 = vst [vmem:[%s351 + $0x8] sm:$0xff] %v821
          %826 = vst [vmem:[%s351 + $0x10] sm:$0xff] %v822
          %827 = vst [vmem:[%s351 + $0x18] sm:$0xff] %v823
        $region76: #{tpu_custom_call.1} parent=51 // pred_fallthru
          _
        %s828 = sand.u32 %s219, 1
        %s829 = scalar_lea.sflag [#allocation6], %s828
        %s830 = sand.u32 %s219, 1
        %s831 = smul.addr %s830, 32
        %s832 = scalar_lea.vmem [#allocation10], %s831
        // Predicated region
        $region77: #{tpu_custom_call.1} parent=51 // pred_check
          %p833 = pneg %p229
        $region78: #{tpu_custom_call.1} parent=51 // pred_check_branch
          %835 = sbr.rel (%p833) target = $region80
        $region79: #{tpu_custom_call.1} parent=51 // pred_region
          %s836 = smul.u32 %s28, %s29
          %s837 = smul.u32 4, %s836
          %s839 = ssub.s32 512, 512
          %840 = vsyncadd %s829, %s839
          %s841 = smul.addr %s837, 128
          %s842 = scalar_lea.hbm %s8, %s841
          %s843 = sshll.u32 %s832, 4
          %s844 = int_to_ptr.vmem [resolvable:$true] %s843
          %849 = dma.vmem_to_hbm [thread:$0]  %s844, 512, %s842, %s829, 128, 128, 8
        $region80: #{tpu_custom_call.1} parent=51 // pred_fallthru
          _
      $region52: #{tpu_custom_call.1} parent=5 // pred_fallthru
        _
      %p850 = scmp.le.s32.totalorder 2, %s19
      // Predicated region
      $region81: #{tpu_custom_call.1} parent=5 // pred_check
        %p851 = pneg %p850
      $region82: #{tpu_custom_call.1} parent=5 // pred_check_branch
        %853 = sbr.rel (%p851) target = $region84
      $region83: #{tpu_custom_call.1} parent=5 // pred_region
        %s854 = ssub.s32 %s19, 2
        // Predicated region
        $region85: #{tpu_custom_call.1} parent=83 // pred_check
          %p855 = pneg %p235
        $region86: #{tpu_custom_call.1} parent=83 // pred_check_branch
          %857 = sbr.rel (%p855) target = $region88
        $region87: #{tpu_custom_call.1} parent=83 // pred_region
          %s858 = sand.u32 %s220, 1
          %s859 = scalar_lea.sflag [#allocation6], %s858
          %s860 = sand.u32 %s220, 1
          %s861 = smul.addr %s860, 32
          %s862 = scalar_lea.vmem [#allocation10], %s861
          %863 = dma.done %s859, 512
        $region88: #{tpu_custom_call.1} parent=83 // pred_fallthru
          _
      $region84: #{tpu_custom_call.1} parent=5 // pred_fallthru
        _
    $region6: #{tpu_custom_call.1} parent=1 // loop_footer
      %s23 = sadd.s32 1, %s19
    $region7: #{tpu_custom_call.1} parent=1 // loop_footer_branch
      %18 = sbr.rel target = $region3
    $region8: #{tpu_custom_call.1} parent=1 // loop_exit
      _
    %864 = vsyncpa [#allocation5], 1
    %s865 = scalar_lea.sflag [#allocation5], 1
    %866 = vsyncpa %s865, 1
    %867 = vsyncpa [#allocation8], 1
    %868 = vsyncpa [#allocation6], 1
    %s869 = scalar_lea.sflag [#allocation6], 1
    %870 = vsyncpa %s869, 1

</llo_original>
